<compile_context>
chip_gen: v7x
topology: tpu7x:2x2x1
jax: 0.10.0
libtpu: 0.0.40
codegen_flags: <defaults>
</compile_context>

<pallas_src>
import functools

import jax
import jax.numpy as jnp
from jax.experimental import pallas as pl
from jax.experimental.pallas import tpu as pltpu


def _dice_partials_kernel(yhat_ref, y_ref, inter_ref, div_ref, *, rows, tile_n):
    """Accumulate per-row, per-lane partial sums of yhat*y and (yhat + y)."""
    i = pl.program_id(1)

    @pl.when(i == 0)
    def _():
        inter_ref[...] = jnp.zeros_like(inter_ref)
        div_ref[...] = jnp.zeros_like(div_ref)

    # Pure-VPU per-lane accumulation: fold the tile's 128-lane chunks together
    # with adds only; the single cross-lane reduce happens in the wrapper.
    n_chunks = tile_n // 128
    acc_i = jnp.zeros((rows, 128), jnp.float32)
    acc_d = jnp.zeros((rows, 128), jnp.float32)
    for c in range(n_chunks):  # static, unrolled
        yh = yhat_ref[:, c * 128:(c + 1) * 128].astype(jnp.float32)
        yy = y_ref[:, c * 128:(c + 1) * 128].astype(jnp.float32)
        acc_i = acc_i + yh * yy
        acc_d = acc_d + (yh + yy)

    inter_ref[...] += acc_i
    div_ref[...] += acc_d


def dice_loss(y_hat, y, classes, smoothing_factor=1.0, *,
              target_tile_n=4096, vmem_budget_bytes=12 * 1024 * 1024):
    """Pallas implementation of DiceLoss.forward.

    y_hat, y: (B, C, H, W) arrays (NCHW, same as PyTorch).
    classes: int (-> range(classes)) or list of class indices (dupes allowed).
    Returns a scalar (float32).
    """
    if isinstance(classes, int):
        class_list = list(range(classes))
    elif isinstance(classes, (list, tuple)):
        class_list = list(classes)
    else:
        raise RuntimeError(
            "DiceLoss classes has to be either an integer, or list of integers.")

    B, C = y_hat.shape[0], y_hat.shape[1]
    K = len(class_list)
    if K > C:
        raise RuntimeError(
            f"The amount of classes ({K}) to calculate is larger than the "
            f"amount of classes in the prediction {C}")

    N = 1
    for d in y_hat.shape[2:]:
        N *= d

    yh3 = y_hat.reshape(B, C, N)
    y3 = y.reshape(B, C, N)

    # Skip unrequested classes at DMA time; keep duplicates (PyTorch semantics).
    if class_list != list(range(C)):
        idx = jnp.asarray(class_list, dtype=jnp.int32)
        yh3 = jnp.take(yh3, idx, axis=1)
        y3 = jnp.take(y3, idx, axis=1)

    rows = B * K                      # folded onto the sublane axis
    yh2 = yh3.reshape(rows, N)
    y2 = y3.reshape(rows, N)
    itemsize = yh2.dtype.itemsize

    # --- Tile sizing under an explicit VMEM budget (2 inputs x 2 buffers). ---
    n_pad128 = -(-N // 128) * 128
    max_tile = max(128, (vmem_budget_bytes // (4 * rows * itemsize)) // 128 * 128)
    tile = min(target_tile_n, n_pad128, max_tile)
    tile = max(128, (tile // 128) * 128)

    n_padded = -(-n_pad128 // tile) * tile
    if n_padded != N:
        # Zero padding is neutral for both intersection and divider sums.
        yh2 = jnp.pad(yh2, ((0, 0), (0, n_padded - N)))
        y2 = jnp.pad(y2, ((0, 0), (0, n_padded - N)))

    n_tiles = n_padded // tile
    groups = 2 if (n_tiles >= 2 and n_tiles % 2 == 0) else 1
    tiles_per_group = n_tiles // groups

    kernel = functools.partial(_dice_partials_kernel, rows=rows, tile_n=tile)

    def in_map(g, i):
        return (0, g * tiles_per_group + i)

    out_map = lambda g, i: (g, 0, 0)

    vmem_needed = (2 * 2 * rows * tile * itemsize      # double-buffered inputs
                   + 2 * 2 * rows * 128 * 4)           # resident f32 outputs
    vmem_limit = int(min(64 * 2**20, max(32 * 2**20, 2 * vmem_needed)))

    cost = pl.CostEstimate(
        flops=3 * rows * n_padded,
        transcendentals=0,
        bytes_accessed=2 * rows * n_padded * itemsize + 2 * groups * rows * 128 * 4,
    )

    inter, div = pl.pallas_call(
        kernel,
        out_shape=(
            jax.ShapeDtypeStruct((groups, rows, 128), jnp.float32),
            jax.ShapeDtypeStruct((groups, rows, 128), jnp.float32),
        ),
        grid=(groups, tiles_per_group),
        in_specs=[
            pl.BlockSpec((rows, tile), in_map),
            pl.BlockSpec((rows, tile), in_map),
        ],
        out_specs=(
            pl.BlockSpec((None, rows, 128), out_map),
            pl.BlockSpec((None, rows, 128), out_map),
        ),
        compiler_params=pltpu.CompilerParams(
            dimension_semantics=("parallel", "arbitrary"),
            vmem_limit_bytes=vmem_limit,
        ),
        cost_estimate=cost,
    )(yh2, y2)

    # O(B*K) epilogue in plain jnp (dice formula, class average, batch mean).
    inter_bc = jnp.sum(inter, axis=(0, 2)).reshape(B, K)
    div_bc = jnp.sum(div, axis=(0, 2)).reshape(B, K)
    dice = (2.0 * inter_bc + smoothing_factor) / (div_bc + smoothing_factor)
    scores = jnp.sum(1.0 - dice, axis=1)               # (B,)
    return jnp.mean(scores / float(K))


def _dice_loss_ref(y_hat, y, classes, smoothing_factor=1.0):
    """Pure-JAX reference mirroring the PyTorch forward, for validation."""
    if isinstance(classes, int):
        class_list = list(range(classes))
    else:
        class_list = list(classes)
    B = y.shape[0]
    scores = jnp.zeros((B,), dtype=jnp.float32)
    for c in class_list:
        pred = y_hat[:, c, ...].reshape(B, -1).astype(jnp.float32)
        targ = y[:, c, ...].reshape(B, -1).astype(jnp.float32)
        inter = jnp.sum(pred * targ, axis=-1)
        divv = jnp.sum(pred, axis=-1) + jnp.sum(targ, axis=-1)
        dice = (2.0 * inter + smoothing_factor) / (divv + smoothing_factor)
        scores = scores + (1.0 - dice)
    return jnp.mean(scores / len(class_list))


if __name__ == "__main__":
    key = jax.random.PRNGKey(0)
    k1, k2 = jax.random.split(key)

    B, C, H, W = 2, 4, 16, 16
    # Predictions in [0, 1] (post-softmax), targets one-hot.
    y_hat = jax.nn.softmax(jax.random.normal(k1, (B, C, H, W), jnp.float32), axis=1)
    labels = jax.random.randint(k2, (B, H, W), 0, C)
    y = jax.nn.one_hot(labels, C, axis=1, dtype=jnp.float32)  # (B, C, H, W)

    smoothing = 1.0

    # Case 1: int classes (all classes).
    loss = jax.block_until_ready(dice_loss(y_hat, y, C, smoothing))
    ref = _dice_loss_ref(y_hat, y, C, smoothing)
    assert jnp.allclose(loss, ref, rtol=1e-5, atol=1e-5), (loss, ref)

    # Case 2: explicit subset of classes (exercises the class-skipping path).
    subset = [0, 2]
    loss2 = jax.block_until_ready(dice_loss(y_hat, y, subset, smoothing))
    ref2 = _dice_loss_ref(y_hat, y, subset, smoothing)
    assert jnp.allclose(loss2, ref2, rtol=1e-5, atol=1e-5), (loss2, ref2)

    print("KERNEL_OK")
</pallas_src>

<mosaic_0001>
module attributes {stable_mosaic.version = 11 : i64} {
  func.func @_dice_partials_kernel(%arg0: i32, %arg1: i32, %arg2: memref<8x256xf32, #tpu.memory_space<vmem>>, %arg3: memref<8x256xf32, #tpu.memory_space<vmem>>, %arg4: memref<1x8x128xf32, #tpu.memory_space<vmem>>, %arg5: memref<1x8x128xf32, #tpu.memory_space<vmem>>) attributes {dimension_semantics = [#tpu.dimension_semantics<parallel>, #tpu.dimension_semantics<arbitrary>], iteration_bounds = array<i64: 1, 1>, scalar_prefetch = 0 : i64, scratch_operands = 0 : i64, tpu.core_type = #tpu.core_type<tc>, window_params = [{transform_indices = @transform_0, window_bounds = array<i64: 8, 256>}, {transform_indices = @transform_1, window_bounds = array<i64: 8, 256>}, {transform_indices = @transform_2, window_bounds = array<i64: 1, 8, 128>}, {transform_indices = @transform_3, window_bounds = array<i64: 1, 8, 128>}]} {
    %c0_i32 = arith.constant 0 : i32
    %0 = arith.cmpi eq, %arg1, %c0_i32 : i32
    %1 = arith.extui %0 : i1 to i32
    %c0_i32_0 = arith.constant 0 : i32
    %2 = arith.cmpi ne, %1, %c0_i32_0 : i32
    scf.if %2 {
      %cst_20 = arith.constant 0.000000e+00 : f32
      %29 = vector.broadcast %cst_20 : f32 to vector<8x128xf32>
      %c0_21 = arith.constant 0 : index
      %c0_22 = arith.constant 0 : index
      %c0_23 = arith.constant 0 : index
      %30 = vector.load %arg4[%c0_21, %c0_22, %c0_23] : memref<1x8x128xf32, #tpu.memory_space<vmem>>, vector<1x8x128xf32>
      %31 = vector.shape_cast %30 : vector<1x8x128xf32> to vector<8x128xf32>
      %32 = vector.shape_cast %29 : vector<8x128xf32> to vector<1x8x128xf32>
      tpu.vector_store %arg4[%c0_21, %c0_22, %c0_23], %32 {strides = array<i32>} : memref<1x8x128xf32, #tpu.memory_space<vmem>>, vector<1x8x128xf32>,
      %cst_24 = arith.constant 0.000000e+00 : f32
      %33 = vector.broadcast %cst_24 : f32 to vector<8x128xf32>
      %c0_25 = arith.constant 0 : index
      %c0_26 = arith.constant 0 : index
      %c0_27 = arith.constant 0 : index
      %34 = vector.load %arg5[%c0_25, %c0_26, %c0_27] : memref<1x8x128xf32, #tpu.memory_space<vmem>>, vector<1x8x128xf32>
      %35 = vector.shape_cast %34 : vector<1x8x128xf32> to vector<8x128xf32>
      %36 = vector.shape_cast %33 : vector<8x128xf32> to vector<1x8x128xf32>
      tpu.vector_store %arg5[%c0_25, %c0_26, %c0_27], %36 {strides = array<i32>} : memref<1x8x128xf32, #tpu.memory_space<vmem>>, vector<1x8x128xf32>,
    } else {
    }
    %cst = arith.constant 0.000000e+00 : f32
    %3 = vector.broadcast %cst : f32 to vector<8x128xf32>
    %cst_1 = arith.constant 0.000000e+00 : f32
    %4 = vector.broadcast %cst_1 : f32 to vector<8x128xf32>
    %c0 = arith.constant 0 : index
    %c0_2 = arith.constant 0 : index
    %5 = vector.load %arg2[%c0, %c0_2] : memref<8x256xf32, #tpu.memory_space<vmem>>, vector<8x128xf32>
    %c0_3 = arith.constant 0 : index
    %c0_4 = arith.constant 0 : index
    %6 = vector.load %arg3[%c0_3, %c0_4] : memref<8x256xf32, #tpu.memory_space<vmem>>, vector<8x128xf32>
    %7 = arith.mulf %5, %6 : vector<8x128xf32>
    %8 = arith.addf %3, %7 : vector<8x128xf32>
    %9 = arith.addf %5, %6 : vector<8x128xf32>
    %10 = arith.addf %4, %9 : vector<8x128xf32>
    %c0_5 = arith.constant 0 : index
    %c128 = arith.constant 128 : index
    %11 = vector.load %arg2[%c0_5, %c128] : memref<8x256xf32, #tpu.memory_space<vmem>>, vector<8x128xf32>
    %c0_6 = arith.constant 0 : index
    %c128_7 = arith.constant 128 : index
    %12 = vector.load %arg3[%c0_6, %c128_7] : memref<8x256xf32, #tpu.memory_space<vmem>>, vector<8x128xf32>
    %13 = arith.mulf %11, %12 : vector<8x128xf32>
    %14 = arith.addf %8, %13 : vector<8x128xf32>
    %15 = arith.addf %11, %12 : vector<8x128xf32>
    %16 = arith.addf %10, %15 : vector<8x128xf32>
    %c0_8 = arith.constant 0 : index
    %c0_9 = arith.constant 0 : index
    %c0_10 = arith.constant 0 : index
    %17 = vector.load %arg4[%c0_8, %c0_9, %c0_10] : memref<1x8x128xf32, #tpu.memory_space<vmem>>, vector<1x8x128xf32>
    %18 = vector.shape_cast %17 : vector<1x8x128xf32> to vector<8x128xf32>
    %19 = arith.addf %18, %14 : vector<8x128xf32>
    %c0_11 = arith.constant 0 : index
    %c0_12 = arith.constant 0 : index
    %c0_13 = arith.constant 0 : index
    %20 = vector.load %arg4[%c0_11, %c0_12, %c0_13] : memref<1x8x128xf32, #tpu.memory_space<vmem>>, vector<1x8x128xf32>
    %21 = vector.shape_cast %20 : vector<1x8x128xf32> to vector<8x128xf32>
    %22 = vector.shape_cast %19 : vector<8x128xf32> to vector<1x8x128xf32>
    tpu.vector_store %arg4[%c0_11, %c0_12, %c0_13], %22 {strides = array<i32>} : memref<1x8x128xf32, #tpu.memory_space<vmem>>, vector<1x8x128xf32>,
    %c0_14 = arith.constant 0 : index
    %c0_15 = arith.constant 0 : index
    %c0_16 = arith.constant 0 : index
    %23 = vector.load %arg5[%c0_14, %c0_15, %c0_16] : memref<1x8x128xf32, #tpu.memory_space<vmem>>, vector<1x8x128xf32>
    %24 = vector.shape_cast %23 : vector<1x8x128xf32> to vector<8x128xf32>
    %25 = arith.addf %24, %16 : vector<8x128xf32>
    %c0_17 = arith.constant 0 : index
    %c0_18 = arith.constant 0 : index
    %c0_19 = arith.constant 0 : index
    %26 = vector.load %arg5[%c0_17, %c0_18, %c0_19] : memref<1x8x128xf32, #tpu.memory_space<vmem>>, vector<1x8x128xf32>
    %27 = vector.shape_cast %26 : vector<1x8x128xf32> to vector<8x128xf32>
    %28 = vector.shape_cast %25 : vector<8x128xf32> to vector<1x8x128xf32>
    tpu.vector_store %arg5[%c0_17, %c0_18, %c0_19], %28 {strides = array<i32>} : memref<1x8x128xf32, #tpu.memory_space<vmem>>, vector<1x8x128xf32>,
    return
  }
  func.func @transform_0(%arg0: i32, %arg1: i32) -> (i32, i32) {
    %c1_i32 = arith.constant 1 : i32
    %0 = arith.muli %arg0, %c1_i32 : i32
    %1 = arith.addi %0, %arg1 : i32
    %c0_i32 = arith.constant 0 : i32
    %c0_i32_0 = arith.constant 0 : i32
    return %c0_i32, %1 : i32, i32
  }
  func.func @transform_1(%arg0: i32, %arg1: i32) -> (i32, i32) {
    %c1_i32 = arith.constant 1 : i32
    %0 = arith.muli %arg0, %c1_i32 : i32
    %1 = arith.addi %0, %arg1 : i32
    %c0_i32 = arith.constant 0 : i32
    %c0_i32_0 = arith.constant 0 : i32
    return %c0_i32, %1 : i32, i32
  }
  func.func @transform_2(%arg0: i32, %arg1: i32) -> (i32, i32, i32) {
    %c0_i32 = arith.constant 0 : i32
    %c0_i32_0 = arith.constant 0 : i32
    %c0_i32_1 = arith.constant 0 : i32
    return %arg0, %c0_i32, %c0_i32_0 : i32, i32, i32
  }
  func.func @transform_3(%arg0: i32, %arg1: i32) -> (i32, i32, i32) {
    %c0_i32 = arith.constant 0 : i32
    %c0_i32_0 = arith.constant 0 : i32
    %c0_i32_1 = arith.constant 0 : i32
    return %arg0, %c0_i32, %c0_i32_0 : i32, i32, i32
  }
}

</mosaic_0001>

<llo_original>
// kernel: tpu_custom_call.1
$region0: #{tpu_custom_call.1}
  #allocation0 [shape = 'u32[]', space=smem, size = 0x4, offset = 0x4, fixed_abs, tag = 'smem constant byte address 0x4 - core index']
  #allocation1 [shape = 'u32[144,128]{1,0:T(1,128)}', space=vmem, size = 0x12000, scoped, tag = 'internal scratch']
  %s0 = inlined_call_operand.hbm [shape: f32[8,256], index: 0, kind: input, shape index: {}]
  %s1 = inlined_call_operand.hbm [shape: f32[8,256], index: 1, kind: input, shape index: {}]
  %s2 = inlined_call_operand.hbm [shape: f32[1,8,128], index: 2, kind: output, shape index: {0}]
  %s3 = inlined_call_operand.hbm [shape: f32[1,8,128], index: 3, kind: output, shape index: {1}]
  %4 = xla_tuple %s2, %s3
  %s5 = sld [smem:[#allocation0]]
  $region38: #{tpu_custom_call.1} parent=0
    _
  %s7 = ssub.s32 1, %s5
  %s8 = scalar_select 0, %s7, %s5
  $region1: #{tpu_custom_call.1} parent=0
    #allocation2 [shape = 'u8[8192]{0}', space=vmem, size = 0x2000, scoped, tag = 'input window, operand 0, single buffered']
    #allocation3 [shape = 's32[1]{0}', space=sflag, size = 0x4, scoped, tag = 'scoped memory for tpu_custom_call.1']
    #allocation4 [shape = 's32[1]{0}', space=sflag, size = 0x4, scoped, tag = 'scoped memory for tpu_custom_call.1']
    #allocation5 [shape = 'u8[8192]{0}', space=vmem, size = 0x2000, scoped, tag = 'input window, operand 1, single buffered']
    #allocation6 [shape = 's32[1]{0}', space=sflag, size = 0x4, scoped, tag = 'scoped memory for tpu_custom_call.1']
    #allocation7 [shape = 'u8[4096]{0}', space=vmem, size = 0x1000, scoped, tag = 'output window, operand 0, single buffered']
    #allocation8 [shape = 'u8[4096]{0}', space=vmem, size = 0x1000, scoped, tag = 'output window, operand 1, single buffered']
    #allocation9 [shape = 's32[1]{0}', space=sflag, size = 0x4, scoped, tag = 'scoped memory for tpu_custom_call.1']
    %9 = vsyncpa [#allocation3], 0
    %10 = vsyncpa [#allocation6], 0
    %11 = vsyncpa [#allocation4], 0
    %12 = vsyncpa [#allocation9], 0
    // Predicated region
    $region2: #{tpu_custom_call.1} parent=1 // pred_check
      _
    $region3: #{tpu_custom_call.1} parent=1 // pred_check_branch
      %14 = sbr.rel (0) target = $region5
    $region4: #{tpu_custom_call.1} parent=1 // pred_region
      %s15 = sadd.s32 0, 0
      %s16 = smul.u32 2, %s15
      %s18 = ssub.s32 256, 256
      %19 = vsyncadd [#allocation3], %s18
      %s20 = smul.addr %s16, 128
      %s21 = scalar_lea.hbm %s0, %s20
      %s23 = sshll.u32 [#allocation2], 4
      %s24 = int_to_ptr.vmem [resolvable:$true] %s23
      %26 = dma.hbm_to_vmem [thread:$0]  %s21, 256, %s24, [#allocation3]
    $region5: #{tpu_custom_call.1} parent=1 // pred_fallthru
      _
    // Predicated region
    $region6: #{tpu_custom_call.1} parent=1 // pred_check
      _
    $region7: #{tpu_custom_call.1} parent=1 // pred_check_branch
      %28 = sbr.rel (0) target = $region9
    $region8: #{tpu_custom_call.1} parent=1 // pred_region
      %s29 = sadd.s32 0, 0
      %s30 = smul.u32 2, %s29
      %s32 = ssub.s32 256, 256
      %33 = vsyncadd [#allocation6], %s32
      %s34 = smul.addr %s30, 128
      %s35 = scalar_lea.hbm %s1, %s34
      %s37 = sshll.u32 [#allocation5], 4
      %s38 = int_to_ptr.vmem [resolvable:$true] %s37
      %40 = dma.hbm_to_vmem [thread:$0]  %s35, 256, %s38, [#allocation6]
    $region9: #{tpu_custom_call.1} parent=1 // pred_fallthru
      _
    // Predicated region
    $region10: #{tpu_custom_call.1} parent=1 // pred_check
      _
    $region11: #{tpu_custom_call.1} parent=1 // pred_check_branch
      %42 = sbr.rel (0) target = $region13
    $region12: #{tpu_custom_call.1} parent=1 // pred_region
      %43 = dma.done [#allocation3], 256
    $region13: #{tpu_custom_call.1} parent=1 // pred_fallthru
      _
    // Predicated region
    $region14: #{tpu_custom_call.1} parent=1 // pred_check
      _
    $region15: #{tpu_custom_call.1} parent=1 // pred_check_branch
      %45 = sbr.rel (0) target = $region17
    $region16: #{tpu_custom_call.1} parent=1 // pred_region
      %46 = dma.done [#allocation6], 256
    $region17: #{tpu_custom_call.1} parent=1 // pred_fallthru
      _
    %s47 = sadd.s32 0, 0
    %s48 = smul.u32 2, %s47
    %s49 = sadd.s32 0, 0
    %s50 = smul.u32 2, %s49
    %p51 = scmp.eq.s32.totalorder 0, 0
    // Predicated region
    $region18: #{tpu_custom_call.1} parent=1 // pred_check
      %p52 = pneg %p51
    $region19: #{tpu_custom_call.1} parent=1 // pred_check_branch
      %54 = sbr.rel (%p52) target = $region21
    $region20: #{tpu_custom_call.1} parent=1 // pred_region
      %55 = vst [vmem:[#allocation7] sm:$0xff] 0.0
      %56 = vst [vmem:[#allocation8] sm:$0xff] 0.0
    $region21: #{tpu_custom_call.1} parent=1 // pred_fallthru
      _
    %v57 = vld [vmem:[#allocation2] sm:$0xff]
    %v58 = vld [vmem:[#allocation5] sm:$0xff]
    %v59 = vmul.f32 %v57, %v58
    %v60 = vadd.f32 %v59, 0.0
    %v61 = vadd.f32 %v57, %v58
    %v62 = vadd.f32 %v61, 0.0
    %v63 = vld [vmem:[#allocation2 + $0x8] sm:$0xff]
    %v64 = vld [vmem:[#allocation5 + $0x8] sm:$0xff]
    %v65 = vmul.f32 %v63, %v64
    %v66 = vadd.f32 %v60, %v65
    %v67 = vadd.f32 %v63, %v64
    %v68 = vadd.f32 %v62, %v67
    %v69 = vld [vmem:[#allocation7] sm:$0xff]
    %v70 = vadd.f32 %v69, %v66
    %71 = vst [vmem:[#allocation7] sm:$0xff] %v70
    %v72 = vld [vmem:[#allocation8] sm:$0xff]
    %v73 = vadd.f32 %v72, %v68
    %74 = vst [vmem:[#allocation8] sm:$0xff] %v73
    // Predicated region
    $region22: #{tpu_custom_call.1} parent=1 // pred_check
      _
    $region23: #{tpu_custom_call.1} parent=1 // pred_check_branch
      %76 = sbr.rel (0) target = $region25
    $region24: #{tpu_custom_call.1} parent=1 // pred_region
      %s78 = ssub.s32 128, 128
      %79 = vsyncadd [#allocation4], %s78
      %s81 = sshll.u32 [#allocation7], 4
      %s82 = int_to_ptr.vmem [resolvable:$true] %s81
      %84 = dma.vmem_to_hbm [thread:$0]  %s82, 128, %s2, [#allocation4]
    $region25: #{tpu_custom_call.1} parent=1 // pred_fallthru
      _
    // Predicated region
    $region26: #{tpu_custom_call.1} parent=1 // pred_check
      _
    $region27: #{tpu_custom_call.1} parent=1 // pred_check_branch
      %86 = sbr.rel (0) target = $region29
    $region28: #{tpu_custom_call.1} parent=1 // pred_region
      %s88 = ssub.s32 128, 128
      %89 = vsyncadd [#allocation9], %s88
      %s91 = sshll.u32 [#allocation8], 4
      %s92 = int_to_ptr.vmem [resolvable:$true] %s91
      %94 = dma.vmem_to_hbm [thread:$0]  %s92, 128, %s3, [#allocation9]
    $region29: #{tpu_custom_call.1} parent=1 // pred_fallthru
      _
    // Predicated region
    $region30: #{tpu_custom_call.1} parent=1 // pred_check
      _
    $region31: #{tpu_custom_call.1} parent=1 // pred_check_branch
      %96 = sbr.rel (0) target = $region33
    $region32: #{tpu_custom_call.1} parent=1 // pred_region
      %97 = dma.done [#allocation4], 128
    $region33: #{tpu_custom_call.1} parent=1 // pred_fallthru
      _
    // Predicated region
    $region34: #{tpu_custom_call.1} parent=1 // pred_check
      _
    $region35: #{tpu_custom_call.1} parent=1 // pred_check_branch
      %99 = sbr.rel (0) target = $region37
    $region36: #{tpu_custom_call.1} parent=1 // pred_region
      %100 = dma.done [#allocation9], 128
    $region37: #{tpu_custom_call.1} parent=1 // pred_fallthru
      _
    %101 = vsyncpa [#allocation3], 1
    %102 = vsyncpa [#allocation6], 1
    %103 = vsyncpa [#allocation4], 1
    %104 = vsyncpa [#allocation9], 1

</llo_original>
